<compile_context>
chip_gen: v7x
topology: tpu7x:2x2x1
jax: 0.10.0
libtpu: 0.0.40
codegen_flags: <defaults>
</compile_context>

<pallas_src>
import functools

import jax
import jax.numpy as jnp
from jax import lax
from jax.experimental import pallas as pl
from jax.experimental.pallas import tpu as pltpu


def _pointer_kernel(rnn_ref, hs_ref, mask_ref, noise_ref,
                    wq_ref, bq_ref, wk_ref, bk_ref,
                    out_ref, *, deterministic):
    rnn = rnn_ref[...]            # (TB, R)    f32
    hs = hs_ref[...]              # (TB, L, H) f32
    msk = mask_ref[...]           # (TB, L)    f32

    TB, L, H = hs.shape

    # q = w_q(rnn_output) : (TB, R) @ (R, H) + (1, H)
    q = jnp.dot(rnn, wq_ref[...], preferred_element_type=jnp.float32) + bq_ref[...]

    # Fold W_k into the query side (removes the (B*L,H)x(H,H) matmul):
    #   v = Wk^T q  -> (TB, H);   c = bk . q -> (TB, 1)
    v = jnp.dot(q, wk_ref[...], preferred_element_type=jnp.float32)
    c = jnp.sum(q * bk_ref[...], axis=-1, keepdims=True)

    # scores = bmm(k, q)  ==  <hs, v> + c
    scores = jnp.sum(hs * v[:, None, :], axis=-1) + c            # (TB, L)

    # scores[mask == 0] = -1e10
    scores = jnp.where(msk == 0, jnp.float32(-10000000000.0), scores)

    # log-softmax over L (for log_probs of the chosen action)
    m = jnp.max(scores, axis=-1, keepdims=True)
    lse = jnp.log(jnp.sum(jnp.exp(scores - m), axis=-1, keepdims=True)) + m
    logp_all = scores - lse                                      # (TB, L)

    if deterministic:
        # Categorical.mode() == argmax of logits.
        sel = scores
    else:
        # Categorical.sample() via Gumbel-max; noise precomputed in wrapper.
        sel = scores + noise_ref[...]

    # argmax with first-occurrence tie-break (matches torch.argmax).
    sel_max = jnp.max(sel, axis=-1, keepdims=True)
    iota = lax.broadcasted_iota(jnp.int32, (TB, L), 1)
    ids = jnp.min(jnp.where(sel == sel_max, iota, L), axis=-1, keepdims=True)  # (TB,1)

    onehot = (iota == ids).astype(jnp.float32)                   # (TB, L)

    # log_probs of chosen ids and gather of the chosen encoded row
    # (one-hot contraction stays on VPU; cheap for moderate L).
    logp = jnp.sum(logp_all * onehot, axis=-1, keepdims=True)    # (TB, 1)
    enc = jnp.sum(hs * onehot[:, :, None], axis=1)               # (TB, H)

    # Single lane-dense packed output: [enc | logp | id | zero-pad]
    out_ref[...] = jnp.zeros(out_ref.shape, out_ref.dtype)
    out_ref[:, :H] = enc
    out_ref[:, H:H + 1] = logp
    out_ref[:, H + 1:H + 2] = ids.astype(jnp.float32)


def _pick_batch_tile(B, L, H, budget_bytes=8 * 1024 * 1024):
    """Largest batch tile whose hidden_state block fits the VMEM budget.

    The tile must either equal B or be a multiple of 8 (sublane rule for the
    2-D (TB, R)/(TB, L)/(TB, P) blocks)."""
    cap = max(1, budget_bytes // (L * H * 4))
    if B <= cap:
        return B
    for tb in range(min(B, cap), 0, -1):
        if B % tb == 0 and tb % 8 == 0:
            return tb
    return B  # fallback: single block


@functools.partial(jax.jit, static_argnames=("deterministic",))
def pointer_network_forward(rnn_output, hidden_state, mask, params,
                            deterministic=True, key=None):
    """Pallas implementation of PointerNetwork.forward."""
    B, R = rnn_output.shape
    _, L, H = hidden_state.shape

    mask2d = mask[..., 0].astype(jnp.float32)                    # (B, L)

    if deterministic:
        noise = jnp.zeros((B, L), jnp.float32)                   # unused by kernel
    else:
        noise = jax.random.gumbel(key, (B, L), jnp.float32)

    # PyTorch Linear stores weight as (out, in).
    wq_t = params["wq_w"].T                                      # (R, H)
    bq = params["wq_b"].reshape(1, H)
    wk = params["wk_w"]                                          # (H, H): q @ wk == Wk^T q
    bk = params["wk_b"].reshape(1, H)

    TB = _pick_batch_tile(B, L, H)
    G = B // TB
    P = ((H + 2 + 127) // 128) * 128                             # lane-dense packed width

    grid_spec = pltpu.PrefetchScalarGridSpec(
        num_scalar_prefetch=0,
        grid=(G,),
        in_specs=[
            pl.BlockSpec((TB, R), lambda i: (i, 0)),
            pl.BlockSpec((TB, L, H), lambda i: (i, 0, 0)),
            pl.BlockSpec((TB, L), lambda i: (i, 0)),
            pl.BlockSpec((TB, L), lambda i: (i, 0)),
            pl.BlockSpec((R, H), lambda i: (0, 0)),              # weights stay resident
            pl.BlockSpec((1, H), lambda i: (0, 0)),
            pl.BlockSpec((H, H), lambda i: (0, 0)),
            pl.BlockSpec((1, H), lambda i: (0, 0)),
        ],
        out_specs=pl.BlockSpec((TB, P), lambda i: (i, 0)),
    )

    cost = pl.CostEstimate(
        flops=2 * B * H * (R + H + 2 * L),
        transcendentals=B * L,
        bytes_accessed=4 * (B * R + B * L * H + 2 * B * L
                            + R * H + H * H + 2 * H + B * P),
    )

    packed = pl.pallas_call(
        functools.partial(_pointer_kernel, deterministic=deterministic),
        out_shape=jax.ShapeDtypeStruct((B, P), jnp.float32),
        grid_spec=grid_spec,
        compiler_params=pltpu.CompilerParams(
            dimension_semantics=("parallel",),
            vmem_limit_bytes=32 * 1024 * 1024),
        cost_estimate=cost,
    )(rnn_output, hidden_state, mask2d, noise, wq_t, bq, wk, bk)

    chosen_encoded = packed[:, :H]
    log_probs = packed[:, H:H + 1]
    ids = packed[:, H + 1:H + 2].astype(jnp.int32)
    return ids, log_probs, chosen_encoded


def _reference(rnn_output, hidden_state, mask, params):
    """Pure-JAX reference of the deterministic forward pass."""
    q = rnn_output @ params["wq_w"].T + params["wq_b"]
    k = hidden_state @ params["wk_w"].T + params["wk_b"]
    scores = jnp.einsum("blh,bh->bl", k, q)
    scores = jnp.where(mask[..., 0] == 0, -10000000000.0, scores)
    ids = jnp.argmax(scores, axis=-1, keepdims=True).astype(jnp.int32)
    logp_all = jax.nn.log_softmax(scores, axis=-1)
    log_probs = jnp.take_along_axis(logp_all, ids, axis=-1)
    chosen = jnp.take_along_axis(
        hidden_state, ids[:, :, None], axis=1)[:, 0, :]
    return ids, log_probs, chosen


if __name__ == "__main__":
    B, L, H, R = 2, 8, 32, 32   # batch, max_length, hidden_dim, rnn_hidden_dim

    key = jax.random.PRNGKey(0)
    k1, k2, k3, k4, k5, k6, k7 = jax.random.split(key, 7)

    rnn_output = jax.random.normal(k1, (B, R), jnp.float32)
    hidden_state = jax.random.normal(k2, (B, L, H), jnp.float32)
    # mask with a few zeros; guarantee at least one valid position per row.
    mask = (jax.random.uniform(k3, (B, L, 1)) > 0.25).astype(jnp.float32)
    mask = mask.at[:, 0, :].set(1.0)

    params = {
        "wq_w": 0.1 * jax.random.normal(k4, (H, R), jnp.float32),  # (out, in)
        "wq_b": 0.1 * jax.random.normal(k5, (H,), jnp.float32),
        "wk_w": 0.1 * jax.random.normal(k6, (H, H), jnp.float32),
        "wk_b": 0.1 * jax.random.normal(k7, (H,), jnp.float32),
    }

    # Deterministic path (Categorical.mode()).
    ids, log_probs, chosen = pointer_network_forward(
        rnn_output, hidden_state, mask, params, deterministic=True)
    jax.block_until_ready((ids, log_probs, chosen))

    ids_ref, logp_ref, chosen_ref = _reference(
        rnn_output, hidden_state, mask, params)

    assert ids.shape == (B, 1) and log_probs.shape == (B, 1) and chosen.shape == (B, H)
    assert jnp.array_equal(ids, ids_ref)
    assert jnp.allclose(log_probs, logp_ref, atol=1e-4, rtol=1e-4)
    assert jnp.allclose(chosen, chosen_ref, atol=1e-5, rtol=1e-5)

    # Sampling path (Gumbel-max; noise from jax.random in the wrapper).
    sids, slogp, senc = pointer_network_forward(
        rnn_output, hidden_state, mask, params,
        deterministic=False, key=jax.random.PRNGKey(42))
    jax.block_until_ready((sids, slogp, senc))

    # Sampled ids must land on unmasked positions with finite, <=0 log-probs,
    # and the gathered encoding must match the sampled row exactly.
    picked_mask = jnp.take_along_axis(mask[..., 0], sids, axis=1)
    assert bool(jnp.all(picked_mask > 0))
    assert bool(jnp.all(jnp.isfinite(slogp))) and bool(jnp.all(slogp <= 0))
    senc_ref = jnp.take_along_axis(hidden_state, sids[:, :, None], axis=1)[:, 0, :]
    assert jnp.allclose(senc, senc_ref, atol=1e-5, rtol=1e-5)

    print("KERNEL_OK")
</pallas_src>

<mosaic_0001>
module attributes {stable_mosaic.version = 11 : i64} {
  func.func @_pointer_kernel(%arg0: i32, %arg1: memref<2x32xf32, #tpu.memory_space<vmem>>, %arg2: memref<2x8x32xf32, #tpu.memory_space<vmem>>, %arg3: memref<2x8xf32, #tpu.memory_space<vmem>>, %arg4: memref<2x8xf32, #tpu.memory_space<vmem>>, %arg5: memref<32x32xf32, #tpu.memory_space<vmem>>, %arg6: memref<1x32xf32, #tpu.memory_space<vmem>>, %arg7: memref<32x32xf32, #tpu.memory_space<vmem>>, %arg8: memref<1x32xf32, #tpu.memory_space<vmem>>, %arg9: memref<2x128xf32, #tpu.memory_space<vmem>>) attributes {dimension_semantics = [#tpu.dimension_semantics<parallel>], iteration_bounds = array<i64: 1>, scalar_prefetch = 0 : i64, scratch_operands = 0 : i64, tpu.core_type = #tpu.core_type<tc>, window_params = [{transform_indices = @transform_0, window_bounds = array<i64: 2, 32>}, {transform_indices = @transform_1, window_bounds = array<i64: 2, 8, 32>}, {transform_indices = @transform_2, window_bounds = array<i64: 2, 8>}, {transform_indices = @transform_3, window_bounds = array<i64: 2, 8>}, {pipeline_mode = #tpu.pipeline_mode<synchronous>, transform_indices = @transform_4, window_bounds = array<i64: 32, 32>}, {pipeline_mode = #tpu.pipeline_mode<synchronous>, transform_indices = @transform_5, window_bounds = array<i64: 1, 32>}, {pipeline_mode = #tpu.pipeline_mode<synchronous>, transform_indices = @transform_6, window_bounds = array<i64: 32, 32>}, {pipeline_mode = #tpu.pipeline_mode<synchronous>, transform_indices = @transform_7, window_bounds = array<i64: 1, 32>}, {transform_indices = @transform_8, window_bounds = array<i64: 2, 128>}]} {
    %c0 = arith.constant 0 : index
    %c0_0 = arith.constant 0 : index
    %0 = vector.load %arg1[%c0, %c0_0] : memref<2x32xf32, #tpu.memory_space<vmem>>, vector<2x32xf32>
    %c0_1 = arith.constant 0 : index
    %c0_2 = arith.constant 0 : index
    %c0_3 = arith.constant 0 : index
    %1 = vector.load %arg2[%c0_1, %c0_2, %c0_3] : memref<2x8x32xf32, #tpu.memory_space<vmem>>, vector<2x8x32xf32>
    %c0_4 = arith.constant 0 : index
    %c0_5 = arith.constant 0 : index
    %2 = vector.load %arg3[%c0_4, %c0_5] : memref<2x8xf32, #tpu.memory_space<vmem>>, vector<2x8xf32>
    %c0_6 = arith.constant 0 : index
    %c0_7 = arith.constant 0 : index
    %3 = vector.load %arg5[%c0_6, %c0_7] : memref<32x32xf32, #tpu.memory_space<vmem>>, vector<32x32xf32>
    %cst = arith.constant dense<0.000000e+00> : vector<2x32xf32>
    %4 = tpu.matmul %0, %3, %cst {dimension_numbers = #tpu.dot_dimension_numbers<[1], [0], [0], [1], [0, 0, 1, 1], [], []>} : vector<2x32xf32>, vector<32x32xf32>, vector<2x32xf32> -> vector<2x32xf32>
    %c0_8 = arith.constant 0 : index
    %c0_9 = arith.constant 0 : index
    %5 = vector.load %arg6[%c0_8, %c0_9] : memref<1x32xf32, #tpu.memory_space<vmem>>, vector<1x32xf32>
    %6 = vector.broadcast %5 : vector<1x32xf32> to vector<2x32xf32>
    %7 = arith.addf %4, %6 : vector<2x32xf32>
    %c0_10 = arith.constant 0 : index
    %c0_11 = arith.constant 0 : index
    %8 = vector.load %arg7[%c0_10, %c0_11] : memref<32x32xf32, #tpu.memory_space<vmem>>, vector<32x32xf32>
    %cst_12 = arith.constant dense<0.000000e+00> : vector<2x32xf32>
    %9 = tpu.matmul %7, %8, %cst_12 {dimension_numbers = #tpu.dot_dimension_numbers<[1], [0], [0], [1], [0, 0, 1, 1], [], []>} : vector<2x32xf32>, vector<32x32xf32>, vector<2x32xf32> -> vector<2x32xf32>
    %c0_13 = arith.constant 0 : index
    %c0_14 = arith.constant 0 : index
    %10 = vector.load %arg8[%c0_13, %c0_14] : memref<1x32xf32, #tpu.memory_space<vmem>>, vector<1x32xf32>
    %11 = vector.broadcast %10 : vector<1x32xf32> to vector<2x32xf32>
    %12 = arith.mulf %7, %11 : vector<2x32xf32>
    %cst_15 = arith.constant dense<0.000000e+00> : vector<2xf32>
    %13 = vector.multi_reduction <add>, %12, %cst_15 [1] : vector<2x32xf32> to vector<2xf32>
    %14 = vector.shape_cast %13 : vector<2xf32> to vector<2x1xf32>
    %15 = vector.shape_cast %9 : vector<2x32xf32> to vector<2x1x32xf32>
    %16 = vector.broadcast %15 : vector<2x1x32xf32> to vector<2x8x32xf32>
    %17 = arith.mulf %1, %16 : vector<2x8x32xf32>
    %cst_16 = arith.constant dense<0.000000e+00> : vector<2x8xf32>
    %18 = vector.multi_reduction <add>, %17, %cst_16 [2] : vector<2x8x32xf32> to vector<2x8xf32>
    %19 = vector.broadcast %14 : vector<2x1xf32> to vector<2x8xf32>
    %20 = arith.addf %18, %19 : vector<2x8xf32>
    %cst_17 = arith.constant 0.000000e+00 : f32
    %21 = vector.broadcast %cst_17 : f32 to vector<2x8xf32>
    %22 = arith.cmpf oeq, %2, %21 : vector<2x8xf32>
    %cst_18 = arith.constant -1.000000e+10 : f32
    %23 = vector.broadcast %cst_18 : f32 to vector<2x8xf32>
    %24 = arith.select %22, %23, %20 : vector<2x8xi1>, vector<2x8xf32>
    %cst_19 = arith.constant dense<0xFF800000> : vector<2xf32>
    %25 = vector.multi_reduction <maximumf>, %24, %cst_19 [1] : vector<2x8xf32> to vector<2xf32>
    %26 = vector.shape_cast %25 : vector<2xf32> to vector<2x1xf32>
    %27 = vector.broadcast %26 : vector<2x1xf32> to vector<2x8xf32>
    %28 = arith.subf %24, %27 : vector<2x8xf32>
    %29 = math.exp %28 : vector<2x8xf32>
    %cst_20 = arith.constant dense<0.000000e+00> : vector<2xf32>
    %30 = vector.multi_reduction <add>, %29, %cst_20 [1] : vector<2x8xf32> to vector<2xf32>
    %31 = vector.shape_cast %30 : vector<2xf32> to vector<2x1xf32>
    %32 = math.log %31 : vector<2x1xf32>
    %33 = arith.addf %32, %26 : vector<2x1xf32>
    %34 = vector.broadcast %33 : vector<2x1xf32> to vector<2x8xf32>
    %35 = arith.subf %24, %34 : vector<2x8xf32>
    %cst_21 = arith.constant dense<0xFF800000> : vector<2xf32>
    %36 = vector.multi_reduction <maximumf>, %24, %cst_21 [1] : vector<2x8xf32> to vector<2xf32>
    %37 = vector.shape_cast %36 : vector<2xf32> to vector<2x1xf32>
    %38 = tpu.iota {dimensions = array<i32: 1>} : vector<2x8xi32>
    %39 = vector.broadcast %37 : vector<2x1xf32> to vector<2x8xf32>
    %40 = arith.cmpf oeq, %24, %39 : vector<2x8xf32>
    %c8_i32 = arith.constant 8 : i32
    %41 = vector.broadcast %c8_i32 : i32 to vector<2x8xi32>
    %42 = arith.select %40, %38, %41 : vector<2x8xi1>, vector<2x8xi32>
    %cst_22 = arith.constant dense<2147483647> : vector<2xi32>
    %43 = vector.multi_reduction <minsi>, %42, %cst_22 [1] : vector<2x8xi32> to vector<2xi32>
    %44 = vector.shape_cast %43 : vector<2xi32> to vector<2x1xi32>
    %45 = vector.broadcast %44 : vector<2x1xi32> to vector<2x8xi32>
    %46 = arith.cmpi eq, %38, %45 : vector<2x8xi32>
    %47 = arith.extui %46 : vector<2x8xi1> to vector<2x8xi32>
    %48 = arith.sitofp %47 : vector<2x8xi32> to vector<2x8xf32>
    %49 = arith.mulf %35, %48 : vector<2x8xf32>
    %cst_23 = arith.constant dense<0.000000e+00> : vector<2xf32>
    %50 = vector.multi_reduction <add>, %49, %cst_23 [1] : vector<2x8xf32> to vector<2xf32>
    %51 = vector.shape_cast %50 : vector<2xf32> to vector<2x1xf32>
    %52 = vector.shape_cast %48 : vector<2x8xf32> to vector<2x8x1xf32>
    %53 = vector.broadcast %52 : vector<2x8x1xf32> to vector<2x8x32xf32>
    %54 = arith.mulf %1, %53 : vector<2x8x32xf32>
    %cst_24 = arith.constant dense<0.000000e+00> : vector<2x32xf32>
    %55 = vector.multi_reduction <add>, %54, %cst_24 [1] : vector<2x8x32xf32> to vector<2x32xf32>
    %cst_25 = arith.constant 0.000000e+00 : f32
    %56 = vector.broadcast %cst_25 : f32 to vector<2x128xf32>
    %c0_26 = arith.constant 0 : index
    %c0_27 = arith.constant 0 : index
    %57 = vector.load %arg9[%c0_26, %c0_27] : memref<2x128xf32, #tpu.memory_space<vmem>>, vector<2x128xf32>
    tpu.vector_store %arg9[%c0_26, %c0_27], %56 {strides = array<i32>} : memref<2x128xf32, #tpu.memory_space<vmem>>, vector<2x128xf32>,
    %c0_28 = arith.constant 0 : index
    %c0_29 = arith.constant 0 : index
    %58 = vector.load %arg9[%c0_28, %c0_29] : memref<2x128xf32, #tpu.memory_space<vmem>>, vector<2x32xf32>
    tpu.vector_store %arg9[%c0_28, %c0_29], %55 {strides = array<i32>} : memref<2x128xf32, #tpu.memory_space<vmem>>, vector<2x32xf32>,
    %c0_30 = arith.constant 0 : index
    %c32 = arith.constant 32 : index
    %59 = vector.load %arg9[%c0_30, %c32] : memref<2x128xf32, #tpu.memory_space<vmem>>, vector<2x1xf32>
    tpu.vector_store %arg9[%c0_30, %c32], %51 {strides = array<i32>} : memref<2x128xf32, #tpu.memory_space<vmem>>, vector<2x1xf32>,
    %60 = arith.sitofp %44 : vector<2x1xi32> to vector<2x1xf32>
    %c0_31 = arith.constant 0 : index
    %c33 = arith.constant 33 : index
    %61 = vector.load %arg9[%c0_31, %c33] : memref<2x128xf32, #tpu.memory_space<vmem>>, vector<2x1xf32>
    tpu.vector_store %arg9[%c0_31, %c33], %60 {strides = array<i32>} : memref<2x128xf32, #tpu.memory_space<vmem>>, vector<2x1xf32>,
    return
  }
  func.func @transform_0(%arg0: i32) -> (i32, i32) {
    %c0_i32 = arith.constant 0 : i32
    %c0_i32_0 = arith.constant 0 : i32
    return %arg0, %c0_i32 : i32, i32
  }
  func.func @transform_1(%arg0: i32) -> (i32, i32, i32) {
    %c0_i32 = arith.constant 0 : i32
    %c0_i32_0 = arith.constant 0 : i32
    %c0_i32_1 = arith.constant 0 : i32
    return %arg0, %c0_i32, %c0_i32_0 : i32, i32, i32
  }
  func.func @transform_2(%arg0: i32) -> (i32, i32) {
    %c0_i32 = arith.constant 0 : i32
    %c0_i32_0 = arith.constant 0 : i32
    return %arg0, %c0_i32 : i32, i32
  }
  func.func @transform_3(%arg0: i32) -> (i32, i32) {
    %c0_i32 = arith.constant 0 : i32
    %c0_i32_0 = arith.constant 0 : i32
    return %arg0, %c0_i32 : i32, i32
  }
  func.func @transform_4(%arg0: i32) -> (i32, i32) {
    %c0_i32 = arith.constant 0 : i32
    %c0_i32_0 = arith.constant 0 : i32
    %c0_i32_1 = arith.constant 0 : i32
    return %c0_i32, %c0_i32_0 : i32, i32
  }
  func.func @transform_5(%arg0: i32) -> (i32, i32) {
    %c0_i32 = arith.constant 0 : i32
    %c0_i32_0 = arith.constant 0 : i32
    %c0_i32_1 = arith.constant 0 : i32
    return %c0_i32, %c0_i32_0 : i32, i32
  }
  func.func @transform_6(%arg0: i32) -> (i32, i32) {
    %c0_i32 = arith.constant 0 : i32
    %c0_i32_0 = arith.constant 0 : i32
    %c0_i32_1 = arith.constant 0 : i32
    return %c0_i32, %c0_i32_0 : i32, i32
  }
  func.func @transform_7(%arg0: i32) -> (i32, i32) {
    %c0_i32 = arith.constant 0 : i32
    %c0_i32_0 = arith.constant 0 : i32
    %c0_i32_1 = arith.constant 0 : i32
    return %c0_i32, %c0_i32_0 : i32, i32
  }
  func.func @transform_8(%arg0: i32) -> (i32, i32) {
    %c0_i32 = arith.constant 0 : i32
    %c0_i32_0 = arith.constant 0 : i32
    return %arg0, %c0_i32 : i32, i32
  }
}

</mosaic_0001>

<llo_original>
// kernel: pointer_network_forward.1
$region0: #{pointer_network_forward.1}
  #allocation0 [shape = 'u32[]', space=smem, size = 0x4, offset = 0x4, fixed_abs, tag = 'smem constant byte address 0x4 - core index']
  #allocation1 [shape = 'u32[144,128]{1,0:T(1,128)}', space=vmem, size = 0x12000, scoped, tag = 'internal scratch']
  %s0 = inlined_call_operand.vmem [shape: f32[2,32], index: 0, kind: input, shape index: {}]
  %s1 = inlined_call_operand.vmem [shape: f32[2,8,32], index: 1, kind: input, shape index: {}]
  %s2 = inlined_call_operand.vmem [shape: f32[2,8], index: 2, kind: input, shape index: {}]
  %s3 = inlined_call_operand.vmem [shape: f32[2,8], index: 3, kind: input, shape index: {}]
  %s4 = inlined_call_operand.vmem [shape: f32[32,32], index: 4, kind: input, shape index: {}]
  %s5 = inlined_call_operand.vmem [shape: f32[1,32], index: 5, kind: input, shape index: {}]
  %s6 = inlined_call_operand.vmem [shape: f32[32,32], index: 6, kind: input, shape index: {}]
  %s7 = inlined_call_operand.vmem [shape: f32[1,32], index: 7, kind: input, shape index: {}]
  %s8 = inlined_call_operand.vmem [shape: f32[2,128], index: 8, kind: output, shape index: {}]
  %s9 = sld [smem:[#allocation0]]
  $region42: #{pointer_network_forward.1} parent=0
    _
  %s11 = ssub.s32 1, %s9
  %s12 = scalar_select 0, %s11, %s9
  // Predicated region
  $region2: #{pointer_network_forward.1} parent=0 // pred_check
    _
  $region3: #{pointer_network_forward.1} parent=0 // pred_check_branch
    %14 = sbr.rel (0) target = $region5
  $region4: #{pointer_network_forward.1} parent=0 // pred_region
    _
  $region5: #{pointer_network_forward.1} parent=0 // pred_fallthru
    _
  // Predicated region
  $region6: #{pointer_network_forward.1} parent=0 // pred_check
    _
  $region7: #{pointer_network_forward.1} parent=0 // pred_check_branch
    %16 = sbr.rel (0) target = $region9
  $region8: #{pointer_network_forward.1} parent=0 // pred_region
    _
  $region9: #{pointer_network_forward.1} parent=0 // pred_fallthru
    _
  // Predicated region
  $region10: #{pointer_network_forward.1} parent=0 // pred_check
    _
  $region11: #{pointer_network_forward.1} parent=0 // pred_check_branch
    %18 = sbr.rel (0) target = $region13
  $region12: #{pointer_network_forward.1} parent=0 // pred_region
    _
  $region13: #{pointer_network_forward.1} parent=0 // pred_fallthru
    _
  // Predicated region
  $region14: #{pointer_network_forward.1} parent=0 // pred_check
    _
  $region15: #{pointer_network_forward.1} parent=0 // pred_check_branch
    %20 = sbr.rel (0) target = $region17
  $region16: #{pointer_network_forward.1} parent=0 // pred_region
    _
  $region17: #{pointer_network_forward.1} parent=0 // pred_fallthru
    _
  // Predicated region
  $region18: #{pointer_network_forward.1} parent=0 // pred_check
    _
  $region19: #{pointer_network_forward.1} parent=0 // pred_check_branch
    %22 = sbr.rel (0) target = $region21
  $region20: #{pointer_network_forward.1} parent=0 // pred_region
    _
  $region21: #{pointer_network_forward.1} parent=0 // pred_fallthru
    _
  // Predicated region
  $region22: #{pointer_network_forward.1} parent=0 // pred_check
    _
  $region23: #{pointer_network_forward.1} parent=0 // pred_check_branch
    %24 = sbr.rel (0) target = $region25
  $region24: #{pointer_network_forward.1} parent=0 // pred_region
    _
  $region25: #{pointer_network_forward.1} parent=0 // pred_fallthru
    _
  // Predicated region
  $region26: #{pointer_network_forward.1} parent=0 // pred_check
    _
  $region27: #{pointer_network_forward.1} parent=0 // pred_check_branch
    %26 = sbr.rel (0) target = $region29
  $region28: #{pointer_network_forward.1} parent=0 // pred_region
    _
  $region29: #{pointer_network_forward.1} parent=0 // pred_fallthru
    _
  // Predicated region
  $region30: #{pointer_network_forward.1} parent=0 // pred_check
    _
  $region31: #{pointer_network_forward.1} parent=0 // pred_check_branch
    %28 = sbr.rel (0) target = $region33
  $region32: #{pointer_network_forward.1} parent=0 // pred_region
    _
  $region33: #{pointer_network_forward.1} parent=0 // pred_fallthru
    _
  %v29 = vld [vmem:[%s0] sm:$0x3]
  %v30 = vld [vmem:[%s1] sm:$0xff]
  %v31 = vld [vmem:[%s1 + $0x8] sm:$0xff]
  %v32 = vld [vmem:[%s2] sm:$0x3]
  %v33 = vld [vmem:[%s4] sm:$0xff]
  %v34 = vld [vmem:[%s4 + $0x8] sm:$0xff]
  %v35 = vld [vmem:[%s4 + $0x10] sm:$0xff]
  %v36 = vld [vmem:[%s4 + $0x18] sm:$0xff]
  %v37 = vld [vmem:[%s5] sm:$0x1]
  %v39 = vlaneseq
  %v40 = vshrl.u32 %v39, 7
  %v41 = vsub.s32 0, %v40
  %v42 = vrot.slane %v37, %v41
  %vm44 = vcmask 261120
  %v46 = vsel %vm44, %v29, 0
  %48 = vmatprep.subr.mxu0 0.0
  %49 = vmatpush1.msra.mxu0 %v33
  %50 = vmatprep.subr.mxu0 0.0
  %51 = vmatpush1.msra.mxu0 %v34
  %52 = vmatprep.subr.mxu0 0.0
  %53 = vmatpush1.msra.mxu0 %v35
  %54 = vmatprep.subr.mxu0 0.0
  %55 = vmatpush1.msra.mxu0 %v36
  %56 = vmatprep.subr.mxu0 0.0
  %57 = vmatpush1.msra.mxu0 0.0
  %58 = vmatprep.subr.mxu0 0.0
  %59 = vmatpush1.msra.mxu0 0.0
  %60 = vmatprep.subr.mxu0 0.0
  %61 = vmatpush1.msra.mxu0 0.0
  %62 = vmatprep.subr.mxu0 0.0
  %63 = vmatpush1.msra.mxu0 0.0
  %64 = vmatprep.subr.mxu0 0.0
  %65 = vmatpush1.msra.mxu0 0.0
  %66 = vmatprep.subr.mxu0 0.0
  %67 = vmatpush1.msra.mxu0 0.0
  %68 = vmatprep.subr.mxu0 0.0
  %69 = vmatpush1.msra.mxu0 0.0
  %70 = vmatprep.subr.mxu0 0.0
  %71 = vmatpush1.msra.mxu0 0.0
  %72 = vmatprep.subr.mxu0 0.0
  %73 = vmatpush1.msra.mxu0 0.0
  %74 = vmatprep.subr.mxu0 0.0
  %75 = vmatpush1.msra.mxu0 0.0
  %76 = vmatprep.subr.mxu0 0.0
  %77 = vmatpush1.msra.mxu0 0.0
  %78 = vmatprep.subr.mxu0 0.0
  %79 = vmatpush1.msra.mxu0 0.0
  %80 = vmatprep.subr.mxu0 0.0
  %81 = vmatpush1.msra.mxu0 0.0
  %82 = vmatprep.subr.mxu0 0.0
  %83 = vmatpush1.msra.mxu0 0.0
  %84 = vmatprep.subr.mxu0 0.0
  %85 = vmatpush1.msra.mxu0 0.0
  %86 = vmatprep.subr.mxu0 0.0
  %87 = vmatpush1.msra.mxu0 0.0
  %88 = vmatprep.subr.mxu0 0.0
  %89 = vmatpush1.msra.mxu0 0.0
  %90 = vmatprep.subr.mxu0 0.0
  %91 = vmatpush1.msra.mxu0 0.0
  %92 = vmatprep.subr.mxu0 0.0
  %93 = vmatpush1.msra.mxu0 0.0
  %94 = vmatprep.subr.mxu0 0.0
  %95 = vmatpush1.msra.mxu0 0.0
  %96 = vmatprep.subr.mxu0 0.0
  %97 = vmatpush1.msra.mxu0 0.0
  %98 = vmatprep.subr.mxu0 0.0
  %99 = vmatpush1.msra.mxu0 0.0
  %100 = vmatprep.subr.mxu0 0.0
  %101 = vmatpush1.msra.mxu0 0.0
  %102 = vmatprep.subr.mxu0 0.0
  %103 = vmatpush1.msra.mxu0 0.0
  %104 = vmatprep.subr.mxu0 0.0
  %105 = vmatpush1.msra.mxu0 0.0
  %106 = vmatprep.subr.mxu0 0.0
  %107 = vmatpush1.msra.mxu0 0.0
  %108 = vmatprep.subr.mxu0 0.0
  %109 = vmatpush1.msra.mxu0 0.0
  %110 = vmatprep.subr.mxu0 0.0
  %111 = vmatpush1.msra.mxu0 0.0
  %112 = vmatprep.mubr.f32.mxu0 0.0
  %113 = vmatmul.mubr.f32.gmra.mrb[0].mxu0 %v46
  %v114 = vpop.f32.mrb[0].mxu0
  %v115 = vadd.f32 %v42, %v114
  %v116 = vpop.f32.mrb[0].mxu0
  %117 = vdwg.mxu0
  %v118 = vld [vmem:[%s6] sm:$0xff]
  %v119 = vld [vmem:[%s6 + $0x8] sm:$0xff]
  %v120 = vld [vmem:[%s6 + $0x10] sm:$0xff]
  %v121 = vld [vmem:[%s6 + $0x18] sm:$0xff]
  %v123 = vsel %vm44, %v115, 0
  %125 = vmatprep.subr.mxu0 0.0
  %126 = vmatpush1.msra.mxu0 %v118
  %127 = vmatprep.subr.mxu0 0.0
  %128 = vmatpush1.msra.mxu0 %v119
  %129 = vmatprep.subr.mxu0 0.0
  %130 = vmatpush1.msra.mxu0 %v120
  %131 = vmatprep.subr.mxu0 0.0
  %132 = vmatpush1.msra.mxu0 %v121
  %133 = vmatprep.subr.mxu0 0.0
  %134 = vmatpush1.msra.mxu0 0.0
  %135 = vmatprep.subr.mxu0 0.0
  %136 = vmatpush1.msra.mxu0 0.0
  %137 = vmatprep.subr.mxu0 0.0
  %138 = vmatpush1.msra.mxu0 0.0
  %139 = vmatprep.subr.mxu0 0.0
  %140 = vmatpush1.msra.mxu0 0.0
  %141 = vmatprep.subr.mxu0 0.0
  %142 = vmatpush1.msra.mxu0 0.0
  %143 = vmatprep.subr.mxu0 0.0
  %144 = vmatpush1.msra.mxu0 0.0
  %145 = vmatprep.subr.mxu0 0.0
  %146 = vmatpush1.msra.mxu0 0.0
  %147 = vmatprep.subr.mxu0 0.0
  %148 = vmatpush1.msra.mxu0 0.0
  %149 = vmatprep.subr.mxu0 0.0
  %150 = vmatpush1.msra.mxu0 0.0
  %151 = vmatprep.subr.mxu0 0.0
  %152 = vmatpush1.msra.mxu0 0.0
  %153 = vmatprep.subr.mxu0 0.0
  %154 = vmatpush1.msra.mxu0 0.0
  %155 = vmatprep.subr.mxu0 0.0
  %156 = vmatpush1.msra.mxu0 0.0
  %157 = vmatprep.subr.mxu0 0.0
  %158 = vmatpush1.msra.mxu0 0.0
  %159 = vmatprep.subr.mxu0 0.0
  %160 = vmatpush1.msra.mxu0 0.0
  %161 = vmatprep.subr.mxu0 0.0
  %162 = vmatpush1.msra.mxu0 0.0
  %163 = vmatprep.subr.mxu0 0.0
  %164 = vmatpush1.msra.mxu0 0.0
  %165 = vmatprep.subr.mxu0 0.0
  %166 = vmatpush1.msra.mxu0 0.0
  %167 = vmatprep.subr.mxu0 0.0
  %168 = vmatpush1.msra.mxu0 0.0
  %169 = vmatprep.subr.mxu0 0.0
  %170 = vmatpush1.msra.mxu0 0.0
  %171 = vmatprep.subr.mxu0 0.0
  %172 = vmatpush1.msra.mxu0 0.0
  %173 = vmatprep.subr.mxu0 0.0
  %174 = vmatpush1.msra.mxu0 0.0
  %175 = vmatprep.subr.mxu0 0.0
  %176 = vmatpush1.msra.mxu0 0.0
  %177 = vmatprep.subr.mxu0 0.0
  %178 = vmatpush1.msra.mxu0 0.0
  %179 = vmatprep.subr.mxu0 0.0
  %180 = vmatpush1.msra.mxu0 0.0
  %181 = vmatprep.subr.mxu0 0.0
  %182 = vmatpush1.msra.mxu0 0.0
  %183 = vmatprep.subr.mxu0 0.0
  %184 = vmatpush1.msra.mxu0 0.0
  %185 = vmatprep.subr.mxu0 0.0
  %186 = vmatpush1.msra.mxu0 0.0
  %187 = vmatprep.subr.mxu0 0.0
  %188 = vmatpush1.msra.mxu0 0.0
  %189 = vmatprep.mubr.f32.mxu0 0.0
  %190 = vmatmul.mubr.f32.gmra.mrb[0].mxu0 %v123
  %v191 = vpop.f32.mrb[0].mxu0
  %v192 = vadd.f32 0.0, %v191
  %v193 = vpop.f32.mrb[0].mxu0
  %194 = vdwg.mxu0
  %v195 = vld [vmem:[%s7] sm:$0x1]
  %v197 = vlaneseq
  %v198 = vshrl.u32 %v197, 7
  %v199 = vsub.s32 0, %v198
  %v200 = vrot.slane %v195, %v199
  %v202 = vmul.f32 %v115, %v200
  %vm203 = vcmask 254976
  %v204 = vsel %vm203, %v202, 0.0
  %205 = vadd.xlane.f32.xlu0 %v204
  %v206 = vpop.xlane.xlu0 %205
  %v209 = vunpack.c.l.s4 1966171168
  %v210 = vunpack.c.0.s8 %v209
  %v211 = vlaneseq
  %v212 = vshrl.u32 %v211, 7
  %v213 = vsub.s32 %v210, %v212
  %v214 = vrot.slane %v192, %v213
  %v215 = vcombine.high %v214, %v214
  %v217 = vunpack.c.l.s4 1966171168
  %v218 = vunpack.c.0.s8 %v217
  %v219 = vlaneseq
  %v220 = vshrl.u32 %v219, 7
  %v221 = vsub.s32 %v218, %v220
  %v222 = vrot.slane %v214, %v221
  %v224 = vunpack.c.l.s4 1966171168
  %v225 = vunpack.c.0.s8 %v224
  %v226 = vlaneseq
  %v227 = vshrl.u32 %v226, 7
  %v228 = vsub.s32 %v225, %v227
  %v229 = vrot.slane %v215, %v228
  %v230 = vlaneseq
  %v231 = vshrl.u32 %v230, 7
  %v232 = vsub.s32 0, %v231
  %v233 = vrot.slane %v222, %v232
  %v234 = vlaneseq
  %v235 = vshrl.u32 %v234, 7
  %v236 = vsub.s32 0, %v235
  %v237 = vrot.slane %v229, %v236
  %v240 = vmul.f32 %v30, %v233
  %v241 = vmul.f32 %v31, %v237
  %v242 = vsel %vm44, %v240, 0.0
  %243 = vadd.xlane.f32.xlu0 %v242
  %v244 = vpop.xlane.xlu0 %243
  %v245 = vsel %vm44, %v241, 0.0
  %246 = vadd.xlane.f32.xlu0 %v245
  %v247 = vpop.xlane.xlu0 %246
  %v249 = vlaneseq
  %v250 = vshrl.u32 %v249, 7
  %v251 = vsub.s32 0, %v250
  %v252 = vrot.slane %v206, %v251
  %v253 = vlaneseq
  %v254 = vshrl.u32 %v253, 7
  %v255 = vsub.s32 1, %v254
  %v256 = vrot.slane %v206, %v255
  %v259 = vadd.f32 %v244, %v252
  %v260 = vadd.f32 %v247, %v256
  %vm261 = vcmp.eq.f32.partialorder %v32, 0.0
  %264 = vset.pattern.permute.xlu0 0
  %265 = vperm.xlu0 %264, %v259
  %v266 = vpop.permute.xlu0 %265
  %267 = vset.pattern.permute.xlu0 0
  %268 = vperm.xlu0 %267, %v260
  %v269 = vpop.permute.xlu0 %268
  %v270 = vlaneseq
  %v271 = vand.u32 %v270, 127
  %v272 = vlaneseq
  %v273 = vshrl.u32 %v272, 7
  %v274 = vsub.s32 %v271, %v273
  %v275 = vrot.slane %v266, %v274
  %v276 = vlaneseq
  %v277 = vshrl.u32 %v276, 7
  %v278 = vsub.s32 %v271, %v277
  %v279 = vrot.slane %v269, %v278
  %vm280 = vcmask 1041409
  %v281 = vsel %vm280, %v279, %v275
  %v283 = vsel %vm261, -1e+10, %v281
  %vm284 = vcmask 58368
  %v285 = vsel %vm284, %v283, -inf
  %286 = vmax.xlane.f32.xlu0 %v285
  %v287 = vpop.xlane.xlu0 %286
  %v288 = vsub.f32 %v283, %v287
  %v289 = vmul.f32 %v288, 1.442695
  %v290 = vpow.pop %v289
  %v291 = vsel %vm284, %v290, 0.0
  %292 = vadd.xlane.f32.xlu0 %v291
  %v293 = vpop.xlane.xlu0 %292
  %v294 = vlog2.pop %v293
  %v295 = vmul.f32 %v294, 0.6931472
  %v296 = vadd.f32 %v295, %v287
  %v297 = vsub.f32 %v283, %v296
  %vm298 = vcmp.eq.f32.partialorder %v283, %v287
  %v299 = vsel %vm298, %v271, 8
  %v300 = vsel %vm284, %v299, 2147483647
  %v301 = vand.u32 %v300, 65535
  %v302 = vshra.s32 %v300, 16
  %v303 = vcvt.s32.f32 %v301
  %v304 = vcvt.s32.f32 %v302
  %305 = vmin.xlane.f32.xlu0 %v304
  %v306 = vpop.xlane.xlu0 %305
  %vm307 = vcmp.eq.f32.partialorder %v304, %v306
  %v308 = vsel %vm307, %v303, inf
  %309 = vmin.xlane.f32.xlu0 %v308
  %v310 = vpop.xlane.xlu0 %309
  %v311 = vcvt.f32.s32 %v310
  %v312 = vcvt.f32.s32 %v306
  %v313 = vshll.u32 %v312, 16
  %v314 = vadd.s32 %v313, %v311
  %vm315 = vcmp.eq.s32.totalorder %v271, %v314
  %v316 = vsel %vm315, 1, 0
  %v317 = vcvt.s32.f32 %v316
  %v318 = vmul.f32 %v297, %v317
  %v319 = vsel %vm284, %v318, 0.0
  %320 = vadd.xlane.f32.xlu0 %v319
  %v321 = vpop.xlane.xlu0 %320
  %v322 = vlaneseq
  %v323 = vshrl.u32 %v322, 7
  %v324 = vsub.s32 0, %v323
  %v325 = vrot.slane %v317, %v324
  %327 = vbcast.lane.b32.xlu0 %v325, 256
  %v328 = vpop.permute.xlu0 %327
  %v329 = vlaneseq
  %v330 = vshrl.u32 %v329, 7
  %v331 = vsub.s32 1, %v330
  %v332 = vrot.slane %v317, %v331
  %334 = vbcast.lane.b32.xlu0 %v332, 256
  %v335 = vpop.permute.xlu0 %334
  %v336 = vmul.f32 %v30, %v328
  %v337 = vmul.f32 %v31, %v335
  %v338 = vsel %vm44, %v336, 0.0
  %v339 = vrot.slane %v338, 4
  %v340 = vadd.f32 %v338, %v339
  %v341 = vrot.slane %v340, 2
  %v342 = vadd.f32 %v340, %v341
  %v343 = vrot.slane %v342, 1
  %v344 = vadd.f32 %v342, %v343
  %v345 = vsel %vm44, %v337, 0.0
  %v346 = vrot.slane %v345, 4
  %v347 = vadd.f32 %v345, %v346
  %v348 = vrot.slane %v347, 2
  %v349 = vadd.f32 %v347, %v348
  %v350 = vrot.slane %v349, 1
  %v351 = vadd.f32 %v349, %v350
  %352 = vst [vmem:[%s8] sm:$0x3] 0.0
  %v355 = vsel %vm280, %v351, %v344
  %357 = vst.msk [vmem:[%s8] sm:$0x3] %vm203, %v355
  %vm358 = vcmask 263424
  %359 = vst.msk [vmem:[%s8] sm:$0x3] %vm358, %v321
  %v360 = vcvt.s32.f32 %v314
  %vm361 = vcmask 271624
  %362 = vst.msk [vmem:[%s8] sm:$0x3] %vm361, %v360
  // Predicated region
  $region34: #{pointer_network_forward.1} parent=0 // pred_check
    _
  $region35: #{pointer_network_forward.1} parent=0 // pred_check_branch
    %364 = sbr.rel (0) target = $region37
  $region36: #{pointer_network_forward.1} parent=0 // pred_region
    _
  $region37: #{pointer_network_forward.1} parent=0 // pred_fallthru
    _
  // Predicated region
  $region38: #{pointer_network_forward.1} parent=0 // pred_check
    _
  $region39: #{pointer_network_forward.1} parent=0 // pred_check_branch
    %366 = sbr.rel (0) target = $region41
  $region40: #{pointer_network_forward.1} parent=0 // pred_region
    _
  $region41: #{pointer_network_forward.1} parent=0 // pred_fallthru
    _

</llo_original>
